<compile_context>
chip_gen: v7x
topology: tpu7x:2x2x1
jax: 0.10.0
libtpu: 0.0.40
codegen_flags: <defaults>
</compile_context>

<pallas_src>
import jax
import jax.numpy as jnp
from jax import lax
from jax.experimental import pallas as pl
from jax.experimental.pallas import tpu as pltpu


_TILE_TARGET_BYTES = 2 * 1024 * 1024  # ~2 MiB per input buffer (v7x-safe, double-buffered)


def _choose_batch_tile(B, C, itemsize):
    """Pick batch tile TB: full-extent when small, else a multiple of 8 sized to ~2 MiB."""
    if B * C * itemsize <= _TILE_TARGET_BYTES:
        return int(B)                      # full-extent block is always legal
    tb = (_TILE_TARGET_BYTES // (C * itemsize)) // 8 * 8
    return int(max(8, min(tb, B)))


def _make_cross_entropy_kernel(B, TB):
    # Python float => inlined literal; never a captured jax array.
    inv_B = 1.0 / float(B)

    def kernel(pred_ref, tgt_ref, loss_ref, acc_ref):
        i = pl.program_id(0)

        @pl.when(i == 0)
        def _():
            acc_ref[...] = jnp.zeros_like(acc_ref)

        # Upcast in-register (free: VPU slot has slack on this mem-bound kernel).
        logits = pred_ref[...].astype(jnp.float32)                # (TB, C)
        tgt = tgt_ref[...]                                        # (TB, 1) int32

        # Numerically stable log-softmax pieces.  The target gather uses
        # `shifted` directly -- the +m in lse and +m in the picked logit cancel.
        m = jnp.max(logits, axis=-1, keepdims=True)               # (TB, 1)
        shifted = logits - m                                      # (TB, C)
        lse_shifted = jnp.log(
            jnp.sum(jnp.exp(shifted), axis=-1, keepdims=True))    # (TB, 1)

        col = lax.broadcasted_iota(jnp.int32, shifted.shape, 1)   # (TB, C)
        picked_shifted = jnp.sum(
            jnp.where(col == tgt, shifted, 0.0), axis=-1, keepdims=True)  # (TB, 1)

        per_sample = lse_shifted - picked_shifted                 # (TB, 1) = -log p[target]

        # Mask rows of a ragged last tile (select => padded garbage/NaNs never
        # leak), then accumulate the partial sum.
        row = i * TB + lax.broadcasted_iota(jnp.int32, per_sample.shape, 0)
        per_sample = jnp.where(row < B, per_sample, 0.0)
        acc_ref[...] += jnp.sum(per_sample, axis=0, keepdims=True)

        # Write the scalar result exactly once, at the final grid step.
        @pl.when(i == pl.num_programs(0) - 1)
        def _():
            loss_ref[...] = acc_ref[...] * inv_B

    return kernel


def get_loss(pred, target, trans_feat=None):
    """Pallas equivalent of PointCNN get_loss.forward (trans_feat is unused)."""
    del trans_feat  # not part of the loss
    B, C = pred.shape
    tgt2d = target.astype(jnp.int32).reshape(B, 1)

    TB = _choose_batch_tile(B, C, pred.dtype.itemsize)
    grid = (pl.cdiv(B, TB),)

    # NOTE: for very large B on v7x (2 TensorCores) a two-pass variant --
    # per-tile partial sums written to a (num_tiles, 1) output with
    # dimension_semantics=("parallel",) plus a tiny wrapper-side jnp.sum --
    # would let both cores stream half of `pred`; the serial accumulator below
    # is already at HBM roofline on single-TC chips.
    loss = pl.pallas_call(
        _make_cross_entropy_kernel(B, TB),
        out_shape=jax.ShapeDtypeStruct((1, 1), jnp.float32),
        grid=grid,
        in_specs=[
            pl.BlockSpec((TB, C), lambda i: (i, 0)),   # logits in native dtype
            pl.BlockSpec((TB, 1), lambda i: (i, 0)),   # int32 targets
        ],
        out_specs=pl.BlockSpec((1, 1), lambda i: (0, 0)),
        scratch_shapes=[pltpu.VMEM((1, 1), jnp.float32)],
        compiler_params=pltpu.CompilerParams(
            dimension_semantics=("arbitrary",)),
    )(pred, tgt2d)

    return loss[0, 0]


if __name__ == "__main__":
    key = jax.random.PRNGKey(0)
    k_pred, k_tgt, k_tf = jax.random.split(key, 3)

    B, C = 8, 16          # batch of 8 samples, 16 classes
    pred = jax.random.normal(k_pred, (B, C), dtype=jnp.float32)
    target = jax.random.randint(k_tgt, (B,), 0, C, dtype=jnp.int32)
    trans_feat = jax.random.normal(k_tf, (B, 4, 4), dtype=jnp.float32)  # unused

    loss = get_loss(pred, target, trans_feat)
    jax.block_until_ready(loss)

    # reference check (plain JAX log-softmax cross entropy, mean reduction)
    logp = jax.nn.log_softmax(pred, axis=-1)
    ref = -jnp.mean(logp[jnp.arange(B), target])
    assert jnp.allclose(loss, ref, atol=1e-5, rtol=1e-5), (loss, ref)

    # also exercise the native-bf16 path (no wrapper-side f32 upcast / HBM copy)
    pred_bf16 = pred.astype(jnp.bfloat16)
    loss_bf16 = get_loss(pred_bf16, target, trans_feat)
    jax.block_until_ready(loss_bf16)
    logp_bf = jax.nn.log_softmax(pred_bf16.astype(jnp.float32), axis=-1)
    ref_bf = -jnp.mean(logp_bf[jnp.arange(B), target])
    assert jnp.allclose(loss_bf16, ref_bf, atol=1e-2, rtol=1e-2), (loss_bf16, ref_bf)

    print("KERNEL_OK")
</pallas_src>

<mosaic_0001>
module attributes {stable_mosaic.version = 11 : i64} {
  func.func @kernel(%arg0: i32, %arg1: memref<8x16xf32, #tpu.memory_space<vmem>>, %arg2: memref<8x1xi32, #tpu.memory_space<vmem>>, %arg3: memref<1x1xf32, #tpu.memory_space<vmem>>, %arg4: memref<1x1xf32, #tpu.memory_space<vmem>>) attributes {dimension_semantics = [#tpu.dimension_semantics<arbitrary>], iteration_bounds = array<i64: 1>, scalar_prefetch = 0 : i64, scratch_operands = 1 : i64, tpu.core_type = #tpu.core_type<tc>, window_params = [{transform_indices = @transform_0, window_bounds = array<i64: 8, 16>}, {transform_indices = @transform_1, window_bounds = array<i64: 8, 1>}, {pipeline_mode = #tpu.pipeline_mode<synchronous>, transform_indices = @transform_2, window_bounds = array<i64: 1, 1>}]} {
    %c0_i32 = arith.constant 0 : i32
    %0 = arith.cmpi eq, %arg0, %c0_i32 : i32
    %1 = arith.extui %0 : i1 to i32
    %c0_i32_0 = arith.constant 0 : i32
    %2 = arith.cmpi ne, %1, %c0_i32_0 : i32
    scf.if %2 {
      %cst_16 = arith.constant 0.000000e+00 : f32
      %37 = vector.broadcast %cst_16 : f32 to vector<1x1xf32>
      %c0_17 = arith.constant 0 : index
      %c0_18 = arith.constant 0 : index
      %38 = vector.load %arg4[%c0_17, %c0_18] : memref<1x1xf32, #tpu.memory_space<vmem>>, vector<1x1xf32>
      tpu.vector_store %arg4[%c0_17, %c0_18], %37 {strides = array<i32>} : memref<1x1xf32, #tpu.memory_space<vmem>>, vector<1x1xf32>,
    } else {
    }
    %c0 = arith.constant 0 : index
    %c0_1 = arith.constant 0 : index
    %3 = vector.load %arg1[%c0, %c0_1] : memref<8x16xf32, #tpu.memory_space<vmem>>, vector<8x16xf32>
    %c0_2 = arith.constant 0 : index
    %c0_3 = arith.constant 0 : index
    %4 = vector.load %arg2[%c0_2, %c0_3] : memref<8x1xi32, #tpu.memory_space<vmem>>, vector<8x1xi32>
    %cst = arith.constant dense<0xFF800000> : vector<8xf32>
    %5 = vector.multi_reduction <maximumf>, %3, %cst [1] : vector<8x16xf32> to vector<8xf32>
    %6 = vector.shape_cast %5 : vector<8xf32> to vector<8x1xf32>
    %7 = vector.broadcast %6 : vector<8x1xf32> to vector<8x16xf32>
    %8 = arith.subf %3, %7 : vector<8x16xf32>
    %9 = math.exp %8 : vector<8x16xf32>
    %cst_4 = arith.constant dense<0.000000e+00> : vector<8xf32>
    %10 = vector.multi_reduction <add>, %9, %cst_4 [1] : vector<8x16xf32> to vector<8xf32>
    %11 = vector.shape_cast %10 : vector<8xf32> to vector<8x1xf32>
    %12 = math.log %11 : vector<8x1xf32>
    %13 = tpu.iota {dimensions = array<i32: 1>} : vector<8x16xi32>
    %14 = vector.broadcast %4 : vector<8x1xi32> to vector<8x16xi32>
    %15 = arith.cmpi eq, %13, %14 : vector<8x16xi32>
    %cst_5 = arith.constant 0.000000e+00 : f32
    %16 = vector.broadcast %cst_5 : f32 to vector<8x16xf32>
    %17 = arith.select %15, %8, %16 : vector<8x16xi1>, vector<8x16xf32>
    %cst_6 = arith.constant dense<0.000000e+00> : vector<8xf32>
    %18 = vector.multi_reduction <add>, %17, %cst_6 [1] : vector<8x16xf32> to vector<8xf32>
    %19 = vector.shape_cast %18 : vector<8xf32> to vector<8x1xf32>
    %20 = arith.subf %12, %19 : vector<8x1xf32>
    %c8_i32 = arith.constant 8 : i32
    %21 = arith.muli %arg0, %c8_i32 : i32
    %22 = tpu.iota {dimensions = array<i32: 0>} : vector<8x1xi32>
    %23 = vector.broadcast %21 : i32 to vector<8x1xi32>
    %24 = arith.addi %23, %22 : vector<8x1xi32>
    %c8_i32_7 = arith.constant 8 : i32
    %25 = vector.broadcast %c8_i32_7 : i32 to vector<8x1xi32>
    %26 = arith.cmpi slt, %24, %25 : vector<8x1xi32>
    %cst_8 = arith.constant 0.000000e+00 : f32
    %27 = vector.broadcast %cst_8 : f32 to vector<8x1xf32>
    %28 = arith.select %26, %20, %27 : vector<8x1xi1>, vector<8x1xf32>
    %c0_9 = arith.constant 0 : index
    %c0_10 = arith.constant 0 : index
    %29 = vector.load %arg4[%c0_9, %c0_10] : memref<1x1xf32, #tpu.memory_space<vmem>>, vector<1x1xf32>
    %cst_11 = arith.constant dense<0.000000e+00> : vector<1xf32>
    %30 = vector.multi_reduction <add>, %28, %cst_11 [0] : vector<8x1xf32> to vector<1xf32>
    %31 = vector.shape_cast %30 : vector<1xf32> to vector<1x1xf32>
    %32 = arith.addf %29, %31 : vector<1x1xf32>
    %c0_12 = arith.constant 0 : index
    %c0_13 = arith.constant 0 : index
    %33 = vector.load %arg4[%c0_12, %c0_13] : memref<1x1xf32, #tpu.memory_space<vmem>>, vector<1x1xf32>
    tpu.vector_store %arg4[%c0_12, %c0_13], %32 {strides = array<i32>} : memref<1x1xf32, #tpu.memory_space<vmem>>, vector<1x1xf32>,
    %c0_i32_14 = arith.constant 0 : i32
    %34 = arith.cmpi eq, %arg0, %c0_i32_14 : i32
    %35 = arith.extui %34 : i1 to i32
    %c0_i32_15 = arith.constant 0 : i32
    %36 = arith.cmpi ne, %35, %c0_i32_15 : i32
    scf.if %36 {
      %c0_16 = arith.constant 0 : index
      %c0_17 = arith.constant 0 : index
      %37 = vector.load %arg4[%c0_16, %c0_17] : memref<1x1xf32, #tpu.memory_space<vmem>>, vector<1x1xf32>
      %cst_18 = arith.constant 1.250000e-01 : f32
      %38 = vector.broadcast %cst_18 : f32 to vector<1x1xf32>
      %39 = arith.mulf %37, %38 : vector<1x1xf32>
      %c0_19 = arith.constant 0 : index
      %c0_20 = arith.constant 0 : index
      %40 = vector.load %arg3[%c0_19, %c0_20] : memref<1x1xf32, #tpu.memory_space<vmem>>, vector<1x1xf32>
      tpu.vector_store %arg3[%c0_19, %c0_20], %39 {strides = array<i32>} : memref<1x1xf32, #tpu.memory_space<vmem>>, vector<1x1xf32>,
    } else {
    }
    return
  }
  func.func @transform_0(%arg0: i32) -> (i32, i32) {
    %c0_i32 = arith.constant 0 : i32
    %c0_i32_0 = arith.constant 0 : i32
    return %arg0, %c0_i32 : i32, i32
  }
  func.func @transform_1(%arg0: i32) -> (i32, i32) {
    %c0_i32 = arith.constant 0 : i32
    %c0_i32_0 = arith.constant 0 : i32
    return %arg0, %c0_i32 : i32, i32
  }
  func.func @transform_2(%arg0: i32) -> (i32, i32) {
    %c0_i32 = arith.constant 0 : i32
    %c0_i32_0 = arith.constant 0 : i32
    %c0_i32_1 = arith.constant 0 : i32
    return %c0_i32, %c0_i32_0 : i32, i32
  }
}

</mosaic_0001>

<llo_original>
// kernel: tpu_custom_call.1
$region0: #{tpu_custom_call.1}
  #allocation0 [shape = 'u32[]', space=smem, size = 0x4, offset = 0x4, fixed_abs, tag = 'smem constant byte address 0x4 - core index']
  #allocation1 [shape = 'u32[144,128]{1,0:T(1,128)}', space=vmem, size = 0x12000, scoped, tag = 'internal scratch']
  #allocation2 [shape = 'f32[1,1]{1,0:T(1,128)}', space=vmem, size = 0x200, scoped, tag = 'scratch operand']
  %s0 = inlined_call_operand.vmem [shape: f32[8,16], index: 0, kind: input, shape index: {}]
  %s1 = inlined_call_operand.vmem [shape: s32[8,1], index: 1, kind: input, shape index: {}]
  %s2 = inlined_call_operand.hbm [shape: f32[1,1], index: 2, kind: output, shape index: {}]
  %s3 = sld [smem:[#allocation0]]
  $region26: #{tpu_custom_call.1} parent=0
    _
  %s5 = ssub.s32 1, %s3
  %s6 = scalar_select 0, %s5, %s3
  $region1: #{tpu_custom_call.1} parent=0
    #allocation3 [shape = 'u8[512]{0}', space=vmem, size = 0x400, scoped, tag = 'output window, operand 0, single buffered']
    #allocation4 [shape = 's32[1]{0}', space=sflag, size = 0x4, scoped, tag = 'scoped memory for tpu_custom_call.1']
    %7 = vsyncpa [#allocation4], 0
    // Predicated region
    $region2: #{tpu_custom_call.1} parent=1 // pred_check
      _
    $region3: #{tpu_custom_call.1} parent=1 // pred_check_branch
      %9 = sbr.rel (0) target = $region5
    $region4: #{tpu_custom_call.1} parent=1 // pred_region
      _
    $region5: #{tpu_custom_call.1} parent=1 // pred_fallthru
      _
    // Predicated region
    $region6: #{tpu_custom_call.1} parent=1 // pred_check
      _
    $region7: #{tpu_custom_call.1} parent=1 // pred_check_branch
      %11 = sbr.rel (0) target = $region9
    $region8: #{tpu_custom_call.1} parent=1 // pred_region
      _
    $region9: #{tpu_custom_call.1} parent=1 // pred_fallthru
      _
    %p12 = scmp.eq.s32.totalorder 0, 0
    // Predicated region
    $region10: #{tpu_custom_call.1} parent=1 // pred_check
      %p13 = pneg %p12
    $region11: #{tpu_custom_call.1} parent=1 // pred_check_branch
      %15 = sbr.rel (%p13) target = $region13
    $region12: #{tpu_custom_call.1} parent=1 // pred_region
      %vm16 = vcmask 0
      %17 = vst.msk [vmem:[#allocation2] sm:$0x1] %vm16, 0.0
    $region13: #{tpu_custom_call.1} parent=1 // pred_fallthru
      _
    %v18 = vld [vmem:[%s0] sm:$0xff]
    %v19 = vld [vmem:[%s1] sm:$0xff]
    %vm20 = vcmask 130048
    %v21 = vsel %vm20, %v18, -inf
    %22 = vmax.xlane.f32.xlu0 %v21
    %v23 = vpop.xlane.xlu0 %22
    %v24 = vsub.f32 %v18, %v23
    %v25 = vmul.f32 %v24, 1.442695
    %v26 = vpow.pop %v25
    %v27 = vsel %vm20, %v26, 0.0
    %28 = vadd.xlane.f32.xlu0 %v27
    %v29 = vpop.xlane.xlu0 %28
    %v30 = vlog2.pop %v29
    %v31 = vmul.f32 %v30, 0.6931472
    %v32 = vlaneseq
    %v33 = vand.u32 %v32, 127
    %34 = vset.pattern.permute.xlu0 0
    %35 = vperm.xlu0 %34, %v19
    %v36 = vpop.permute.xlu0 %35
    %vm37 = vcmp.eq.s32.totalorder %v33, %v36
    %v38 = vsel %vm37, %v24, 0.0
    %v39 = vsel %vm20, %v38, 0.0
    %40 = vadd.xlane.f32.xlu0 %v39
    %v41 = vpop.xlane.xlu0 %40
    %v42 = vsub.f32 %v31, %v41
    %s43 = smul.u32 0, 8
    %v44 = vlaneseq
    %v45 = vshrl.u32 %v44, 7
    %v46 = vstv %s43
    %v47 = vadd.s32 %v46, %v45
    %vm48 = vcmp.lt.s32.totalorder %v47, 8
    %v49 = vsel %vm48, %v42, 0.0
    %v50 = vld [vmem:[#allocation2] sm:$0x1]
    %v51 = vrot.slane %v49, 4
    %v52 = vadd.f32 %v49, %v51
    %v53 = vrot.slane %v52, 2
    %v54 = vadd.f32 %v52, %v53
    %v55 = vrot.slane %v54, 1
    %v56 = vadd.f32 %v54, %v55
    %v57 = vadd.f32 %v50, %v56
    %vm58 = vcmask 0
    %59 = vst.msk [vmem:[#allocation2] sm:$0x1] %vm58, %v57
    // Predicated region
    $region14: #{tpu_custom_call.1} parent=1 // pred_check
      %p60 = pneg %p12
    $region15: #{tpu_custom_call.1} parent=1 // pred_check_branch
      %62 = sbr.rel (%p60) target = $region17
    $region16: #{tpu_custom_call.1} parent=1 // pred_region
      %v63 = vld [vmem:[#allocation2] sm:$0x1]
      %v64 = vmul.f32 %v63, 0.125
      %65 = vst.msk [vmem:[#allocation3] sm:$0x1] %vm58, %v64
    $region17: #{tpu_custom_call.1} parent=1 // pred_fallthru
      _
    // Predicated region
    $region18: #{tpu_custom_call.1} parent=1 // pred_check
      _
    $region19: #{tpu_custom_call.1} parent=1 // pred_check_branch
      %67 = sbr.rel (0) target = $region21
    $region20: #{tpu_custom_call.1} parent=1 // pred_region
      %s69 = ssub.s32 16, 16
      %70 = vsyncadd [#allocation4], %s69
      %s72 = sshll.u32 [#allocation3], 4
      %s73 = int_to_ptr.vmem [resolvable:$true] %s72
      %75 = dma.vmem_to_hbm [thread:$0]  %s73, 16, %s2, [#allocation4]
    $region21: #{tpu_custom_call.1} parent=1 // pred_fallthru
      _
    // Predicated region
    $region22: #{tpu_custom_call.1} parent=1 // pred_check
      _
    $region23: #{tpu_custom_call.1} parent=1 // pred_check_branch
      %77 = sbr.rel (0) target = $region25
    $region24: #{tpu_custom_call.1} parent=1 // pred_region
      %78 = dma.done [#allocation4], 16
    $region25: #{tpu_custom_call.1} parent=1 // pred_fallthru
      _
    %79 = vsyncpa [#allocation4], 1

</llo_original>
